<compile_context>
chip_gen: v7x
topology: tpu7x:2x2x1
jax: 0.10.0
libtpu: 0.0.40
codegen_flags: <defaults>
</compile_context>

<pallas_src>
import jax
import jax.numpy as jnp
from jax.experimental import pallas as pl
from jax.experimental.pallas import tpu as pltpu

LEAKY_SLOPE = 0.01    # PyTorch nn.LeakyReLU default negative_slope
NUM_CLASSES = 3
PAD_N = 128           # lane width of the padded final layer / packed output
PROB_LANE = 64        # probs live in lanes [PROB_LANE, PROB_LANE + NUM_CLASSES)
NEG_BIG = -1e30       # final-bias pad value -> softmax auto-masks pad lanes


def teacher_kernel(x_ref,
                   w1, b1, w2, b2, w3, b3, w4, b4, w5, b5, w6, b6,
                   out_ref):
    """One batch tile: 6-layer MLP + LeakyReLU + softmax, packed single output."""

    def matmul_bias(h, w_ref, b_ref):
        # bf16 x bf16 operands, f32 accumulation on the MXU, f32 bias add.
        acc = jnp.dot(h, w_ref[...], preferred_element_type=jnp.float32)
        return acc + b_ref[...]

    def leaky_to_bf16(acc):
        act = jnp.where(acc > 0, acc, LEAKY_SLOPE * acc)   # f32 VPU
        return act.astype(jnp.bfloat16)                    # bf16 operand for next MXU op

    # in-kernel f32 -> bf16 cast (cheap VPU op hidden under the MXU; avoids an
    # extra XLA cast pass over x in HBM)
    h = x_ref[...].astype(jnp.bfloat16)                     # (TB, in)
    h = leaky_to_bf16(matmul_bias(h, w1, b1))               # (TB, 512)
    h = leaky_to_bf16(matmul_bias(h, w2, b2))               # (TB, 256)
    h = leaky_to_bf16(matmul_bias(h, w3, b3))               # (TB, 128)
    h = leaky_to_bf16(matmul_bias(h, w4, b4))               # (TB, 128)  (64 real lanes)
    h = leaky_to_bf16(matmul_bias(h, w5, b5))               # (TB, 128)  (32 real lanes)
    logits = matmul_bias(h, w6, b6)                         # (TB, 128) f32; lanes>=3 ~ -1e30

    # Softmax over lanes. Pad lanes carry NEG_BIG from the bias padding, so the
    # max ignores them and exp underflows to exactly 0 -> no explicit masking.
    m = jnp.max(logits, axis=-1, keepdims=True)
    e = jnp.exp(logits - m)
    denom = jnp.sum(e, axis=-1, keepdims=True)
    probs = e * pl.reciprocal(denom, approx=True)           # EUP slot

    # Pack logits (lanes 0..2) and probs (lanes 64..66) into a single
    # lane-dense 128-wide f32 output tile: halves output HBM writeback.
    probs_hi = pltpu.roll(probs, shift=PROB_LANE, axis=1)   # XLU slot, ~free
    lane = jax.lax.broadcasted_iota(jnp.int32, logits.shape, 1)
    out_ref[...] = jnp.where(lane < PROB_LANE, logits, probs_hi)


def _round_up(x, m):
    return -(-x // m) * m


def _choose_tb(batch, block_batch):
    """Batch tile: big (amortize per-step overhead + MXU weight pushes), MXU-friendly,
    and >=2 tiles for v7x's two TensorCores when the batch is large enough."""
    if batch >= 2 * block_batch:
        return block_batch
    if batch >= 1024:
        return min(block_batch, _round_up(_round_up(batch, 2) // 2, 256))
    return _round_up(batch, 8)          # small batch: one tile, sublane-aligned


def _prep_params(params):
    """bf16 weights / f32 biases; pad narrow layers to 128 lanes (exact: zero
    cols/rows and LeakyReLU(0)=0), final bias pad = NEG_BIG for softmax masking."""
    out_pads = [None, None, None, PAD_N, PAD_N, PAD_N]
    prepped = []
    prev_out = None
    for i in range(6):
        w = params[2 * i].astype(jnp.float32)
        b = params[2 * i + 1].astype(jnp.float32).reshape(1, -1)
        fan_in, fan_out = w.shape
        # pad in-dim to match the (padded) out-dim of the previous layer
        if prev_out is not None and prev_out > fan_in:
            w = jnp.pad(w, ((0, prev_out - fan_in), (0, 0)))
        # pad out-dim to 128 lanes where requested
        tgt = out_pads[i]
        if tgt is not None and tgt > fan_out:
            w = jnp.pad(w, ((0, 0), (0, tgt - fan_out)))
            pad_val = NEG_BIG if i == 5 else 0.0
            b = jnp.pad(b, ((0, 0), (0, tgt - fan_out)), constant_values=pad_val)
            prev_out = tgt
        else:
            prev_out = fan_out
        prepped += [w.astype(jnp.bfloat16), b]
    return prepped


def teacher_forward(x, params, *, block_batch=2048):
    """x: (batch, input_dim) f32; params: [w1,b1,...,w6,b6] with w (in,out), b (1,out).
    Returns (knowledge, probs), each (batch, 3) f32."""
    batch, input_dim = x.shape

    TB = _choose_tb(batch, block_batch)
    n_tiles = pl.cdiv(batch, TB)
    padded_batch = n_tiles * TB
    if padded_batch != batch:
        x = jnp.pad(x, ((0, padded_batch - batch), (0, 0)))

    prepped = _prep_params(params)

    # x tiled over batch; every weight/bias gets a constant index_map so its
    # single block stays resident in VMEM (no per-step re-DMA).
    in_specs = [pl.BlockSpec((TB, input_dim), lambda i: (i, 0))]
    for p in prepped:
        in_specs.append(pl.BlockSpec(p.shape, lambda i: (0, 0)))

    out_spec = pl.BlockSpec((TB, PAD_N), lambda i: (i, 0))
    packed = pl.pallas_call(
        teacher_kernel,
        grid=(n_tiles,),
        in_specs=in_specs,
        out_specs=out_spec,
        out_shape=jax.ShapeDtypeStruct((padded_batch, PAD_N), jnp.float32),
        compiler_params=pltpu.CompilerParams(
            dimension_semantics=("parallel",),     # shard batch tiles across TCs (v7x)
            vmem_limit_bytes=48 * 1024 * 1024,     # > v5e's 16 MiB scoped default,
                                                   # well under v7x 64 MiB physical
        ),
    )(x, *prepped)

    knowledge = packed[:batch, :NUM_CLASSES]
    probs = packed[:batch, PROB_LANE:PROB_LANE + NUM_CLASSES]
    return knowledge, probs


def init_teacher_params(key, input_dim):
    """Deterministic init mimicking PyTorch nn.Linear default U(-1/sqrt(fan_in), +)."""
    dims = [input_dim, 512, 256, 128, 64, 32, 3]
    params = []
    for i in range(6):
        fan_in, fan_out = dims[i], dims[i + 1]
        key, kw, kb = jax.random.split(key, 3)
        bound = 1.0 / (fan_in ** 0.5)
        w = jax.random.uniform(kw, (fan_in, fan_out), jnp.float32, -bound, bound)
        b = jax.random.uniform(kb, (1, fan_out), jnp.float32, -bound, bound)
        params += [w, b]
    return params


def teacher_ref(x, params):
    """Pure-JAX f32 reference matching the PyTorch forward."""
    h = x
    for i in range(5):
        w, b = params[2 * i], params[2 * i + 1]
        h = h @ w + b
        h = jnp.where(h > 0, h, LEAKY_SLOPE * h)
    logits = h @ params[10] + params[11]
    return logits, jax.nn.softmax(logits, axis=-1)


if __name__ == "__main__":
    key = jax.random.PRNGKey(0)
    input_dim = 32
    batch = 8   # small test shape; kernel tiles/parallelizes at large batch

    kx, kp = jax.random.split(key)
    x = jax.random.normal(kx, (batch, input_dim), jnp.float32)
    params = init_teacher_params(kp, input_dim)

    knowledge, probs = teacher_forward(x, params)
    jax.block_until_ready((knowledge, probs))

    # sanity check against pure-f32 reference (tolerance loosened for bf16
    # matmul operands + approx reciprocal in the kernel)
    k_ref, p_ref = teacher_ref(x, params)
    assert knowledge.shape == (batch, NUM_CLASSES)
    assert probs.shape == (batch, NUM_CLASSES)
    assert jnp.allclose(knowledge, k_ref, atol=2e-2, rtol=2e-2)
    assert jnp.allclose(probs, p_ref, atol=1e-2, rtol=2e-2)
    assert jnp.allclose(jnp.sum(probs, axis=-1), 1.0, atol=1e-2)

    print("KERNEL_OK")
</pallas_src>

<mosaic_0001>
module attributes {stable_mosaic.version = 11 : i64} {
  func.func @teacher_kernel(%arg0: i32, %arg1: memref<8x32xf32, #tpu.memory_space<vmem>>, %arg2: memref<32x512xbf16, #tpu.memory_space<vmem>>, %arg3: memref<1x512xf32, #tpu.memory_space<vmem>>, %arg4: memref<512x256xbf16, #tpu.memory_space<vmem>>, %arg5: memref<1x256xf32, #tpu.memory_space<vmem>>, %arg6: memref<256x128xbf16, #tpu.memory_space<vmem>>, %arg7: memref<1x128xf32, #tpu.memory_space<vmem>>, %arg8: memref<128x128xbf16, #tpu.memory_space<vmem>>, %arg9: memref<1x128xf32, #tpu.memory_space<vmem>>, %arg10: memref<128x128xbf16, #tpu.memory_space<vmem>>, %arg11: memref<1x128xf32, #tpu.memory_space<vmem>>, %arg12: memref<128x128xbf16, #tpu.memory_space<vmem>>, %arg13: memref<1x128xf32, #tpu.memory_space<vmem>>, %arg14: memref<8x128xf32, #tpu.memory_space<vmem>>) attributes {dimension_semantics = [#tpu.dimension_semantics<parallel>], iteration_bounds = array<i64: 1>, scalar_prefetch = 0 : i64, scratch_operands = 0 : i64, tpu.core_type = #tpu.core_type<tc>, window_params = [{transform_indices = @transform_0, window_bounds = array<i64: 8, 32>}, {pipeline_mode = #tpu.pipeline_mode<synchronous>, transform_indices = @transform_1, window_bounds = array<i64: 32, 512>}, {pipeline_mode = #tpu.pipeline_mode<synchronous>, transform_indices = @transform_2, window_bounds = array<i64: 1, 512>}, {pipeline_mode = #tpu.pipeline_mode<synchronous>, transform_indices = @transform_3, window_bounds = array<i64: 512, 256>}, {pipeline_mode = #tpu.pipeline_mode<synchronous>, transform_indices = @transform_4, window_bounds = array<i64: 1, 256>}, {pipeline_mode = #tpu.pipeline_mode<synchronous>, transform_indices = @transform_5, window_bounds = array<i64: 256, 128>}, {pipeline_mode = #tpu.pipeline_mode<synchronous>, transform_indices = @transform_6, window_bounds = array<i64: 1, 128>}, {pipeline_mode = #tpu.pipeline_mode<synchronous>, transform_indices = @transform_7, window_bounds = array<i64: 128, 128>}, {pipeline_mode = #tpu.pipeline_mode<synchronous>, transform_indices = @transform_8, window_bounds = array<i64: 1, 128>}, {pipeline_mode = #tpu.pipeline_mode<synchronous>, transform_indices = @transform_9, window_bounds = array<i64: 128, 128>}, {pipeline_mode = #tpu.pipeline_mode<synchronous>, transform_indices = @transform_10, window_bounds = array<i64: 1, 128>}, {pipeline_mode = #tpu.pipeline_mode<synchronous>, transform_indices = @transform_11, window_bounds = array<i64: 128, 128>}, {pipeline_mode = #tpu.pipeline_mode<synchronous>, transform_indices = @transform_12, window_bounds = array<i64: 1, 128>}, {transform_indices = @transform_13, window_bounds = array<i64: 8, 128>}]} {
    %c0 = arith.constant 0 : index
    %c0_0 = arith.constant 0 : index
    %0 = vector.load %arg1[%c0, %c0_0] : memref<8x32xf32, #tpu.memory_space<vmem>>, vector<8x32xf32>
    %1 = arith.truncf %0 : vector<8x32xf32> to vector<8x32xbf16>
    %c0_1 = arith.constant 0 : index
    %c0_2 = arith.constant 0 : index
    %2 = vector.load %arg2[%c0_1, %c0_2] : memref<32x512xbf16, #tpu.memory_space<vmem>>, vector<32x512xbf16>
    %cst = arith.constant dense<0.000000e+00> : vector<8x512xf32>
    %3 = tpu.matmul %1, %2, %cst {dimension_numbers = #tpu.dot_dimension_numbers<[1], [0], [0], [1], [0, 0, 1, 1], [], []>} : vector<8x32xbf16>, vector<32x512xbf16>, vector<8x512xf32> -> vector<8x512xf32>
    %c0_3 = arith.constant 0 : index
    %c0_4 = arith.constant 0 : index
    %4 = vector.load %arg3[%c0_3, %c0_4] : memref<1x512xf32, #tpu.memory_space<vmem>>, vector<1x512xf32>
    %5 = vector.broadcast %4 : vector<1x512xf32> to vector<8x512xf32>
    %6 = arith.addf %3, %5 : vector<8x512xf32>
    %cst_5 = arith.constant 0.000000e+00 : f32
    %7 = vector.broadcast %cst_5 : f32 to vector<8x512xf32>
    %8 = arith.cmpf ogt, %6, %7 : vector<8x512xf32>
    %cst_6 = arith.constant 0.00999999977 : f32
    %9 = vector.broadcast %cst_6 : f32 to vector<8x512xf32>
    %10 = arith.mulf %9, %6 : vector<8x512xf32>
    %11 = arith.select %8, %6, %10 : vector<8x512xi1>, vector<8x512xf32>
    %12 = arith.truncf %11 : vector<8x512xf32> to vector<8x512xbf16>
    %c0_7 = arith.constant 0 : index
    %c0_8 = arith.constant 0 : index
    %13 = vector.load %arg4[%c0_7, %c0_8] : memref<512x256xbf16, #tpu.memory_space<vmem>>, vector<512x256xbf16>
    %cst_9 = arith.constant dense<0.000000e+00> : vector<8x256xf32>
    %14 = tpu.matmul %12, %13, %cst_9 {dimension_numbers = #tpu.dot_dimension_numbers<[1], [0], [0], [1], [0, 0, 1, 1], [], []>} : vector<8x512xbf16>, vector<512x256xbf16>, vector<8x256xf32> -> vector<8x256xf32>
    %c0_10 = arith.constant 0 : index
    %c0_11 = arith.constant 0 : index
    %15 = vector.load %arg5[%c0_10, %c0_11] : memref<1x256xf32, #tpu.memory_space<vmem>>, vector<1x256xf32>
    %16 = vector.broadcast %15 : vector<1x256xf32> to vector<8x256xf32>
    %17 = arith.addf %14, %16 : vector<8x256xf32>
    %cst_12 = arith.constant 0.000000e+00 : f32
    %18 = vector.broadcast %cst_12 : f32 to vector<8x256xf32>
    %19 = arith.cmpf ogt, %17, %18 : vector<8x256xf32>
    %cst_13 = arith.constant 0.00999999977 : f32
    %20 = vector.broadcast %cst_13 : f32 to vector<8x256xf32>
    %21 = arith.mulf %20, %17 : vector<8x256xf32>
    %22 = arith.select %19, %17, %21 : vector<8x256xi1>, vector<8x256xf32>
    %23 = arith.truncf %22 : vector<8x256xf32> to vector<8x256xbf16>
    %c0_14 = arith.constant 0 : index
    %c0_15 = arith.constant 0 : index
    %24 = vector.load %arg6[%c0_14, %c0_15] : memref<256x128xbf16, #tpu.memory_space<vmem>>, vector<256x128xbf16>
    %cst_16 = arith.constant dense<0.000000e+00> : vector<8x128xf32>
    %25 = tpu.matmul %23, %24, %cst_16 {dimension_numbers = #tpu.dot_dimension_numbers<[1], [0], [0], [1], [0, 0, 1, 1], [], []>} : vector<8x256xbf16>, vector<256x128xbf16>, vector<8x128xf32> -> vector<8x128xf32>
    %c0_17 = arith.constant 0 : index
    %c0_18 = arith.constant 0 : index
    %26 = vector.load %arg7[%c0_17, %c0_18] : memref<1x128xf32, #tpu.memory_space<vmem>>, vector<1x128xf32>
    %27 = vector.broadcast %26 : vector<1x128xf32> to vector<8x128xf32>
    %28 = arith.addf %25, %27 : vector<8x128xf32>
    %cst_19 = arith.constant 0.000000e+00 : f32
    %29 = vector.broadcast %cst_19 : f32 to vector<8x128xf32>
    %30 = arith.cmpf ogt, %28, %29 : vector<8x128xf32>
    %cst_20 = arith.constant 0.00999999977 : f32
    %31 = vector.broadcast %cst_20 : f32 to vector<8x128xf32>
    %32 = arith.mulf %31, %28 : vector<8x128xf32>
    %33 = arith.select %30, %28, %32 : vector<8x128xi1>, vector<8x128xf32>
    %34 = arith.truncf %33 : vector<8x128xf32> to vector<8x128xbf16>
    %c0_21 = arith.constant 0 : index
    %c0_22 = arith.constant 0 : index
    %35 = vector.load %arg8[%c0_21, %c0_22] : memref<128x128xbf16, #tpu.memory_space<vmem>>, vector<128x128xbf16>
    %cst_23 = arith.constant dense<0.000000e+00> : vector<8x128xf32>
    %36 = tpu.matmul %34, %35, %cst_23 {dimension_numbers = #tpu.dot_dimension_numbers<[1], [0], [0], [1], [0, 0, 1, 1], [], []>} : vector<8x128xbf16>, vector<128x128xbf16>, vector<8x128xf32> -> vector<8x128xf32>
    %c0_24 = arith.constant 0 : index
    %c0_25 = arith.constant 0 : index
    %37 = vector.load %arg9[%c0_24, %c0_25] : memref<1x128xf32, #tpu.memory_space<vmem>>, vector<1x128xf32>
    %38 = vector.broadcast %37 : vector<1x128xf32> to vector<8x128xf32>
    %39 = arith.addf %36, %38 : vector<8x128xf32>
    %cst_26 = arith.constant 0.000000e+00 : f32
    %40 = vector.broadcast %cst_26 : f32 to vector<8x128xf32>
    %41 = arith.cmpf ogt, %39, %40 : vector<8x128xf32>
    %cst_27 = arith.constant 0.00999999977 : f32
    %42 = vector.broadcast %cst_27 : f32 to vector<8x128xf32>
    %43 = arith.mulf %42, %39 : vector<8x128xf32>
    %44 = arith.select %41, %39, %43 : vector<8x128xi1>, vector<8x128xf32>
    %45 = arith.truncf %44 : vector<8x128xf32> to vector<8x128xbf16>
    %c0_28 = arith.constant 0 : index
    %c0_29 = arith.constant 0 : index
    %46 = vector.load %arg10[%c0_28, %c0_29] : memref<128x128xbf16, #tpu.memory_space<vmem>>, vector<128x128xbf16>
    %cst_30 = arith.constant dense<0.000000e+00> : vector<8x128xf32>
    %47 = tpu.matmul %45, %46, %cst_30 {dimension_numbers = #tpu.dot_dimension_numbers<[1], [0], [0], [1], [0, 0, 1, 1], [], []>} : vector<8x128xbf16>, vector<128x128xbf16>, vector<8x128xf32> -> vector<8x128xf32>
    %c0_31 = arith.constant 0 : index
    %c0_32 = arith.constant 0 : index
    %48 = vector.load %arg11[%c0_31, %c0_32] : memref<1x128xf32, #tpu.memory_space<vmem>>, vector<1x128xf32>
    %49 = vector.broadcast %48 : vector<1x128xf32> to vector<8x128xf32>
    %50 = arith.addf %47, %49 : vector<8x128xf32>
    %cst_33 = arith.constant 0.000000e+00 : f32
    %51 = vector.broadcast %cst_33 : f32 to vector<8x128xf32>
    %52 = arith.cmpf ogt, %50, %51 : vector<8x128xf32>
    %cst_34 = arith.constant 0.00999999977 : f32
    %53 = vector.broadcast %cst_34 : f32 to vector<8x128xf32>
    %54 = arith.mulf %53, %50 : vector<8x128xf32>
    %55 = arith.select %52, %50, %54 : vector<8x128xi1>, vector<8x128xf32>
    %56 = arith.truncf %55 : vector<8x128xf32> to vector<8x128xbf16>
    %c0_35 = arith.constant 0 : index
    %c0_36 = arith.constant 0 : index
    %57 = vector.load %arg12[%c0_35, %c0_36] : memref<128x128xbf16, #tpu.memory_space<vmem>>, vector<128x128xbf16>
    %cst_37 = arith.constant dense<0.000000e+00> : vector<8x128xf32>
    %58 = tpu.matmul %56, %57, %cst_37 {dimension_numbers = #tpu.dot_dimension_numbers<[1], [0], [0], [1], [0, 0, 1, 1], [], []>} : vector<8x128xbf16>, vector<128x128xbf16>, vector<8x128xf32> -> vector<8x128xf32>
    %c0_38 = arith.constant 0 : index
    %c0_39 = arith.constant 0 : index
    %59 = vector.load %arg13[%c0_38, %c0_39] : memref<1x128xf32, #tpu.memory_space<vmem>>, vector<1x128xf32>
    %60 = vector.broadcast %59 : vector<1x128xf32> to vector<8x128xf32>
    %61 = arith.addf %58, %60 : vector<8x128xf32>
    %cst_40 = arith.constant dense<0xFF800000> : vector<8xf32>
    %62 = vector.multi_reduction <maximumf>, %61, %cst_40 [1] : vector<8x128xf32> to vector<8xf32>
    %63 = vector.shape_cast %62 : vector<8xf32> to vector<8x1xf32>
    %64 = vector.broadcast %63 : vector<8x1xf32> to vector<8x128xf32>
    %65 = arith.subf %61, %64 : vector<8x128xf32>
    %66 = math.exp %65 : vector<8x128xf32>
    %cst_41 = arith.constant dense<0.000000e+00> : vector<8xf32>
    %67 = vector.multi_reduction <add>, %66, %cst_41 [1] : vector<8x128xf32> to vector<8xf32>
    %68 = vector.shape_cast %67 : vector<8xf32> to vector<8x1xf32>
    %69 = tpu.reciprocal %68 {approx = true} : vector<8x1xf32> -> vector<8x1xf32>
    %70 = vector.broadcast %69 : vector<8x1xf32> to vector<8x128xf32>
    %71 = arith.mulf %66, %70 : vector<8x128xf32>
    %c64_i32 = arith.constant 64 : i32
    %72 = tpu.dynamic_rotate %71 by %c64_i32 dim 1 : vector<8x128xf32>, i32 -> vector<8x128xf32>
    %73 = tpu.iota {dimensions = array<i32: 1>} : vector<8x128xi32>
    %c64_i32_42 = arith.constant 64 : i32
    %74 = vector.broadcast %c64_i32_42 : i32 to vector<8x128xi32>
    %75 = arith.cmpi slt, %73, %74 : vector<8x128xi32>
    %76 = arith.select %75, %61, %72 : vector<8x128xi1>, vector<8x128xf32>
    %c0_43 = arith.constant 0 : index
    %c0_44 = arith.constant 0 : index
    %77 = vector.load %arg14[%c0_43, %c0_44] : memref<8x128xf32, #tpu.memory_space<vmem>>, vector<8x128xf32>
    tpu.vector_store %arg14[%c0_43, %c0_44], %76 {strides = array<i32>} : memref<8x128xf32, #tpu.memory_space<vmem>>, vector<8x128xf32>,
    return
  }
  func.func @transform_0(%arg0: i32) -> (i32, i32) {
    %c0_i32 = arith.constant 0 : i32
    %c0_i32_0 = arith.constant 0 : i32
    return %arg0, %c0_i32 : i32, i32
  }
  func.func @transform_1(%arg0: i32) -> (i32, i32) {
    %c0_i32 = arith.constant 0 : i32
    %c0_i32_0 = arith.constant 0 : i32
    %c0_i32_1 = arith.constant 0 : i32
    return %c0_i32, %c0_i32_0 : i32, i32
  }
  func.func @transform_2(%arg0: i32) -> (i32, i32) {
    %c0_i32 = arith.constant 0 : i32
    %c0_i32_0 = arith.constant 0 : i32
    %c0_i32_1 = arith.constant 0 : i32
    return %c0_i32, %c0_i32_0 : i32, i32
  }
  func.func @transform_3(%arg0: i32) -> (i32, i32) {
    %c0_i32 = arith.constant 0 : i32
    %c0_i32_0 = arith.constant 0 : i32
    %c0_i32_1 = arith.constant 0 : i32
    return %c0_i32, %c0_i32_0 : i32, i32
  }
  func.func @transform_4(%arg0: i32) -> (i32, i32) {
    %c0_i32 = arith.constant 0 : i32
    %c0_i32_0 = arith.constant 0 : i32
    %c0_i32_1 = arith.constant 0 : i32
    return %c0_i32, %c0_i32_0 : i32, i32
  }
  func.func @transform_5(%arg0: i32) -> (i32, i32) {
    %c0_i32 = arith.constant 0 : i32
    %c0_i32_0 = arith.constant 0 : i32
    %c0_i32_1 = arith.constant 0 : i32
    return %c0_i32, %c0_i32_0 : i32, i32
  }
  func.func @transform_6(%arg0: i32) -> (i32, i32) {
    %c0_i32 = arith.constant 0 : i32
    %c0_i32_0 = arith.constant 0 : i32
    %c0_i32_1 = arith.constant 0 : i32
    return %c0_i32, %c0_i32_0 : i32, i32
  }
  func.func @transform_7(%arg0: i32) -> (i32, i32) {
    %c0_i32 = arith.constant 0 : i32
    %c0_i32_0 = arith.constant 0 : i32
    %c0_i32_1 = arith.constant 0 : i32
    return %c0_i32, %c0_i32_0 : i32, i32
  }
  func.func @transform_8(%arg0: i32) -> (i32, i32) {
    %c0_i32 = arith.constant 0 : i32
    %c0_i32_0 = arith.constant 0 : i32
    %c0_i32_1 = arith.constant 0 : i32
    return %c0_i32, %c0_i32_0 : i32, i32
  }
  func.func @transform_9(%arg0: i32) -> (i32, i32) {
    %c0_i32 = arith.constant 0 : i32
    %c0_i32_0 = arith.constant 0 : i32
    %c0_i32_1 = arith.constant 0 : i32
    return %c0_i32, %c0_i32_0 : i32, i32
  }
  func.func @transform_10(%arg0: i32) -> (i32, i32) {
    %c0_i32 = arith.constant 0 : i32
    %c0_i32_0 = arith.constant 0 : i32
    %c0_i32_1 = arith.constant 0 : i32
    return %c0_i32, %c0_i32_0 : i32, i32
  }
  func.func @transform_11(%arg0: i32) -> (i32, i32) {
    %c0_i32 = arith.constant 0 : i32
    %c0_i32_0 = arith.constant 0 : i32
    %c0_i32_1 = arith.constant 0 : i32
    return %c0_i32, %c0_i32_0 : i32, i32
  }
  func.func @transform_12(%arg0: i32) -> (i32, i32) {
    %c0_i32 = arith.constant 0 : i32
    %c0_i32_0 = arith.constant 0 : i32
    %c0_i32_1 = arith.constant 0 : i32
    return %c0_i32, %c0_i32_0 : i32, i32
  }
  func.func @transform_13(%arg0: i32) -> (i32, i32) {
    %c0_i32 = arith.constant 0 : i32
    %c0_i32_0 = arith.constant 0 : i32
    return %arg0, %c0_i32 : i32, i32
  }
}

</mosaic_0001>

<llo_original>
// kernel: tpu_custom_call.1
$region0: #{tpu_custom_call.1}
  #allocation0 [shape = 'u32[]', space=smem, size = 0x4, offset = 0x4, fixed_abs, tag = 'smem constant byte address 0x4 - core index']
  #allocation1 [shape = 'u32[144,128]{1,0:T(1,128)}', space=vmem, size = 0x12000, scoped, tag = 'internal scratch']
  %s0 = inlined_call_operand.hbm [shape: f32[8,32], index: 0, kind: input, shape index: {}]
  %s1 = inlined_call_operand.hbm [shape: bf16[32,512], index: 1, kind: input, shape index: {}]
  %s2 = inlined_call_operand.vmem [shape: f32[1,512], index: 2, kind: input, shape index: {}]
  %s3 = inlined_call_operand.hbm [shape: bf16[512,256], index: 3, kind: input, shape index: {}]
  %s4 = inlined_call_operand.vmem [shape: f32[1,256], index: 4, kind: input, shape index: {}]
  %s5 = inlined_call_operand.hbm [shape: bf16[256,128], index: 5, kind: input, shape index: {}]
  %s6 = inlined_call_operand.vmem [shape: f32[1,128], index: 6, kind: input, shape index: {}]
  %s7 = inlined_call_operand.hbm [shape: bf16[128,128], index: 7, kind: input, shape index: {}]
  %s8 = inlined_call_operand.vmem [shape: f32[1,128], index: 8, kind: input, shape index: {}]
  %s9 = inlined_call_operand.hbm [shape: bf16[128,128], index: 9, kind: input, shape index: {}]
  %s10 = inlined_call_operand.vmem [shape: f32[1,128], index: 10, kind: input, shape index: {}]
  %s11 = inlined_call_operand.hbm [shape: bf16[128,128], index: 11, kind: input, shape index: {}]
  %s12 = inlined_call_operand.vmem [shape: f32[1,128], index: 12, kind: input, shape index: {}]
  %s13 = inlined_call_operand.hbm [shape: f32[8,128], index: 13, kind: output, shape index: {}]
  %s14 = sld [smem:[#allocation0]]
  $region90: #{tpu_custom_call.1} parent=0
    _
  %s16 = ssub.s32 1, %s14
  %s17 = scalar_select 0, %s16, %s14
  $region1: #{tpu_custom_call.1} parent=0
    #allocation2 [shape = 'u8[4096]{0}', space=vmem, size = 0x1000, scoped, tag = 'input window, operand 0, single buffered']
    #allocation3 [shape = 's32[1]{0}', space=sflag, size = 0x4, scoped, tag = 'scoped memory for tpu_custom_call.1']
    #allocation4 [shape = 's32[1]{0}', space=sflag, size = 0x4, scoped, tag = 'scoped memory for tpu_custom_call.1']
    #allocation5 [shape = 'u8[32768]{0}', space=vmem, size = 0x8000, scoped, tag = 'input window, operand 1, single buffered']
    #allocation6 [shape = 's32[1]{0}', space=sflag, size = 0x4, scoped, tag = 'scoped memory for tpu_custom_call.1']
    #allocation7 [shape = 'u8[262144]{0}', space=vmem, size = 0x40000, scoped, tag = 'input window, operand 3, single buffered']
    #allocation8 [shape = 'u8[65536]{0}', space=vmem, size = 0x10000, scoped, tag = 'input window, operand 5, single buffered']
    #allocation9 [shape = 's32[1]{0}', space=sflag, size = 0x4, scoped, tag = 'scoped memory for tpu_custom_call.1']
    #allocation10 [shape = 'u8[32768]{0}', space=vmem, size = 0x8000, scoped, tag = 'input window, operand 7, single buffered']
    #allocation11 [shape = 'u8[32768]{0}', space=vmem, size = 0x8000, scoped, tag = 'input window, operand 9, single buffered']
    #allocation12 [shape = 's32[1]{0}', space=sflag, size = 0x4, scoped, tag = 'scoped memory for tpu_custom_call.1']
    #allocation13 [shape = 'u8[32768]{0}', space=vmem, size = 0x8000, scoped, tag = 'input window, operand 11, single buffered']
    #allocation14 [shape = 'u8[4096]{0}', space=vmem, size = 0x1000, scoped, tag = 'output window, operand 0, single buffered']
    %18 = vsyncpa [#allocation3], 0
    %19 = vsyncpa [#allocation6], 0
    %20 = vsyncpa [#allocation9], 0
    %21 = vsyncpa [#allocation12], 0
    %22 = vsyncpa [#allocation4], 0
    // Predicated region
    $region2: #{tpu_custom_call.1} parent=1 // pred_check
      _
    $region3: #{tpu_custom_call.1} parent=1 // pred_check_branch
      %24 = sbr.rel (0) target = $region5
    $region4: #{tpu_custom_call.1} parent=1 // pred_region
      %s26 = ssub.s32 128, 128
      %27 = vsyncadd [#allocation3], %s26
      %s29 = sshll.u32 [#allocation2], 4
      %s30 = int_to_ptr.vmem [resolvable:$true] %s29
      %32 = dma.hbm_to_vmem [thread:$0]  %s0, 128, %s30, [#allocation3]
    $region5: #{tpu_custom_call.1} parent=1 // pred_fallthru
      _
    // Predicated region
    $region6: #{tpu_custom_call.1} parent=1 // pred_check
      _
    $region7: #{tpu_custom_call.1} parent=1 // pred_check_branch
      %34 = sbr.rel (0) target = $region9
    $region8: #{tpu_custom_call.1} parent=1 // pred_region
      %s36 = ssub.s32 1024, 1024
      %37 = vsyncadd [#allocation6], %s36
      %s38 = sshll.u32 [#allocation5], 4
      %s39 = int_to_ptr.vmem [resolvable:$true] %s38
      %44 = dma.hbm_to_vmem [thread:$0]  %s1, 1024, %s39, [#allocation6], 256, 256, 16
    $region9: #{tpu_custom_call.1} parent=1 // pred_fallthru
      _
    // Predicated region
    $region10: #{tpu_custom_call.1} parent=1 // pred_check
      _
    $region11: #{tpu_custom_call.1} parent=1 // pred_check_branch
      %46 = sbr.rel (0) target = $region13
    $region12: #{tpu_custom_call.1} parent=1 // pred_region
      _
    $region13: #{tpu_custom_call.1} parent=1 // pred_fallthru
      _
    // Predicated region
    $region14: #{tpu_custom_call.1} parent=1 // pred_check
      _
    $region15: #{tpu_custom_call.1} parent=1 // pred_check_branch
      %48 = sbr.rel (0) target = $region17
    $region16: #{tpu_custom_call.1} parent=1 // pred_region
      %s50 = ssub.s32 8192, 8192
      %51 = vsyncadd [#allocation6], %s50
      %s52 = sshll.u32 [#allocation7], 4
      %s53 = int_to_ptr.vmem [resolvable:$true] %s52
      %58 = dma.hbm_to_vmem [thread:$0]  %s3, 8192, %s53, [#allocation6], 128, 128, 8
    $region17: #{tpu_custom_call.1} parent=1 // pred_fallthru
      _
    // Predicated region
    $region18: #{tpu_custom_call.1} parent=1 // pred_check
      _
    $region19: #{tpu_custom_call.1} parent=1 // pred_check_branch
      %60 = sbr.rel (0) target = $region21
    $region20: #{tpu_custom_call.1} parent=1 // pred_region
      _
    $region21: #{tpu_custom_call.1} parent=1 // pred_fallthru
      _
    // Predicated region
    $region22: #{tpu_custom_call.1} parent=1 // pred_check
      _
    $region23: #{tpu_custom_call.1} parent=1 // pred_check_branch
      %62 = sbr.rel (0) target = $region25
    $region24: #{tpu_custom_call.1} parent=1 // pred_region
      %s64 = ssub.s32 2048, 2048
      %65 = vsyncadd [#allocation9], %s64
      %s66 = sshll.u32 [#allocation8], 4
      %s67 = int_to_ptr.vmem [resolvable:$true] %s66
      %72 = dma.hbm_to_vmem [thread:$0]  %s5, 2048, %s67, [#allocation9], 64, 64, 4
    $region25: #{tpu_custom_call.1} parent=1 // pred_fallthru
      _
    // Predicated region
    $region26: #{tpu_custom_call.1} parent=1 // pred_check
      _
    $region27: #{tpu_custom_call.1} parent=1 // pred_check_branch
      %74 = sbr.rel (0) target = $region29
    $region28: #{tpu_custom_call.1} parent=1 // pred_region
      _
    $region29: #{tpu_custom_call.1} parent=1 // pred_fallthru
      _
    // Predicated region
    $region30: #{tpu_custom_call.1} parent=1 // pred_check
      _
    $region31: #{tpu_custom_call.1} parent=1 // pred_check_branch
      %76 = sbr.rel (0) target = $region33
    $region32: #{tpu_custom_call.1} parent=1 // pred_region
      %s78 = ssub.s32 1024, 1024
      %79 = vsyncadd [#allocation9], %s78
      %s80 = sshll.u32 [#allocation10], 4
      %s81 = int_to_ptr.vmem [resolvable:$true] %s80
      %86 = dma.hbm_to_vmem [thread:$0]  %s7, 1024, %s81, [#allocation9], 64, 64, 4
    $region33: #{tpu_custom_call.1} parent=1 // pred_fallthru
      _
    // Predicated region
    $region34: #{tpu_custom_call.1} parent=1 // pred_check
      _
    $region35: #{tpu_custom_call.1} parent=1 // pred_check_branch
      %88 = sbr.rel (0) target = $region37
    $region36: #{tpu_custom_call.1} parent=1 // pred_region
      _
    $region37: #{tpu_custom_call.1} parent=1 // pred_fallthru
      _
    // Predicated region
    $region38: #{tpu_custom_call.1} parent=1 // pred_check
      _
    $region39: #{tpu_custom_call.1} parent=1 // pred_check_branch
      %90 = sbr.rel (0) target = $region41
    $region40: #{tpu_custom_call.1} parent=1 // pred_region
      %s92 = ssub.s32 1024, 1024
      %93 = vsyncadd [#allocation12], %s92
      %s94 = sshll.u32 [#allocation11], 4
      %s95 = int_to_ptr.vmem [resolvable:$true] %s94
      %100 = dma.hbm_to_vmem [thread:$0]  %s9, 1024, %s95, [#allocation12], 64, 64, 4
    $region41: #{tpu_custom_call.1} parent=1 // pred_fallthru
      _
    // Predicated region
    $region42: #{tpu_custom_call.1} parent=1 // pred_check
      _
    $region43: #{tpu_custom_call.1} parent=1 // pred_check_branch
      %102 = sbr.rel (0) target = $region45
    $region44: #{tpu_custom_call.1} parent=1 // pred_region
      _
    $region45: #{tpu_custom_call.1} parent=1 // pred_fallthru
      _
    // Predicated region
    $region46: #{tpu_custom_call.1} parent=1 // pred_check
      _
    $region47: #{tpu_custom_call.1} parent=1 // pred_check_branch
      %104 = sbr.rel (0) target = $region49
    $region48: #{tpu_custom_call.1} parent=1 // pred_region
      %s106 = ssub.s32 1024, 1024
      %107 = vsyncadd [#allocation12], %s106
      %s108 = sshll.u32 [#allocation13], 4
      %s109 = int_to_ptr.vmem [resolvable:$true] %s108
      %114 = dma.hbm_to_vmem [thread:$0]  %s11, 1024, %s109, [#allocation12], 64, 64, 4
    $region49: #{tpu_custom_call.1} parent=1 // pred_fallthru
      _
    // Predicated region
    $region50: #{tpu_custom_call.1} parent=1 // pred_check
      _
    $region51: #{tpu_custom_call.1} parent=1 // pred_check_branch
      %116 = sbr.rel (0) target = $region53
    $region52: #{tpu_custom_call.1} parent=1 // pred_region
      _
    $region53: #{tpu_custom_call.1} parent=1 // pred_fallthru
      _
    // Predicated region
    $region54: #{tpu_custom_call.1} parent=1 // pred_check
      _
    $region55: #{tpu_custom_call.1} parent=1 // pred_check_branch
      %118 = sbr.rel (0) target = $region57
    $region56: #{tpu_custom_call.1} parent=1 // pred_region
      %119 = dma.done [#allocation3], 128
    $region57: #{tpu_custom_call.1} parent=1 // pred_fallthru
      _
    // Predicated region
    $region58: #{tpu_custom_call.1} parent=1 // pred_check
      _
    $region59: #{tpu_custom_call.1} parent=1 // pred_check_branch
      %121 = sbr.rel (0) target = $region61
    $region60: #{tpu_custom_call.1} parent=1 // pred_region
      %122 = dma.done [#allocation6], 1024
    $region61: #{tpu_custom_call.1} parent=1 // pred_fallthru
      _
    // Predicated region
    $region62: #{tpu_custom_call.1} parent=1 // pred_check
      _
    $region63: #{tpu_custom_call.1} parent=1 // pred_check_branch
      %124 = sbr.rel (0) target = $region65
    $region64: #{tpu_custom_call.1} parent=1 // pred_region
      %125 = dma.done [#allocation6], 8192
    $region65: #{tpu_custom_call.1} parent=1 // pred_fallthru
      _
    // Predicated region
    $region66: #{tpu_custom_call.1} parent=1 // pred_check
      _
    $region67: #{tpu_custom_call.1} parent=1 // pred_check_branch
      %127 = sbr.rel (0) target = $region69
    $region68: #{tpu_custom_call.1} parent=1 // pred_region
      %128 = dma.done [#allocation9], 2048
    $region69: #{tpu_custom_call.1} parent=1 // pred_fallthru
      _
    // Predicated region
    $region70: #{tpu_custom_call.1} parent=1 // pred_check
      _
    $region71: #{tpu_custom_call.1} parent=1 // pred_check_branch
      %130 = sbr.rel (0) target = $region73
    $region72: #{tpu_custom_call.1} parent=1 // pred_region
      %131 = dma.done [#allocation9], 1024
    $region73: #{tpu_custom_call.1} parent=1 // pred_fallthru
      _
    // Predicated region
    $region74: #{tpu_custom_call.1} parent=1 // pred_check
      _
    $region75: #{tpu_custom_call.1} parent=1 // pred_check_branch
      %133 = sbr.rel (0) target = $region77
    $region76: #{tpu_custom_call.1} parent=1 // pred_region
      %134 = dma.done [#allocation12], 1024
    $region77: #{tpu_custom_call.1} parent=1 // pred_fallthru
      _
    // Predicated region
    $region78: #{tpu_custom_call.1} parent=1 // pred_check
      _
    $region79: #{tpu_custom_call.1} parent=1 // pred_check_branch
      %136 = sbr.rel (0) target = $region81
    $region80: #{tpu_custom_call.1} parent=1 // pred_region
      %137 = dma.done [#allocation12], 1024
    $region81: #{tpu_custom_call.1} parent=1 // pred_fallthru
      _
    %v139 = vld [vmem:[#allocation2] sm:$0xff]
    %v140 = vpack.c.bf16 %v139, %v139
    %v141 = vld [vmem:[#allocation5] sm:$0xff]
    %v142 = vld [vmem:[#allocation5 + $0x8] sm:$0xff]
    %v143 = vld [vmem:[#allocation5 + $0x10] sm:$0xff]
    %v144 = vld [vmem:[#allocation5 + $0x18] sm:$0xff]
    %v145 = vld [vmem:[#allocation5 + $0x20] sm:$0xff]
    %v146 = vld [vmem:[#allocation5 + $0x28] sm:$0xff]
    %v147 = vld [vmem:[#allocation5 + $0x30] sm:$0xff]
    %v148 = vld [vmem:[#allocation5 + $0x38] sm:$0xff]
    %v149 = vld [vmem:[%s2] sm:$0xf]
    %v151 = vlaneseq
    %v152 = vshrl.u32 %v151, 7
    %v153 = vsub.s32 0, %v152
    %v154 = vrot.slane %v149, %v153
    %v155 = vlaneseq
    %v156 = vshrl.u32 %v155, 7
    %v157 = vsub.s32 1, %v156
    %v158 = vrot.slane %v149, %v157
    %v159 = vlaneseq
    %v160 = vshrl.u32 %v159, 7
    %v161 = vsub.s32 2, %v160
    %v162 = vrot.slane %v149, %v161
    %v163 = vlaneseq
    %v164 = vshrl.u32 %v163, 7
    %v165 = vsub.s32 3, %v164
    %v166 = vrot.slane %v149, %v165
    %v179 = vunpack.c.l.b16 %v141
    %v180 = vunpack.c.h.b16 %v141
    %v181 = vunpack.c.l.b16 %v142
    %v182 = vunpack.c.h.b16 %v142
    %v183 = vunpack.c.l.b16 %v143
    %v184 = vunpack.c.h.b16 %v143
    %v185 = vunpack.c.l.b16 %v144
    %v186 = vunpack.c.h.b16 %v144
    %v187 = vunpack.c.l.b16 %v145
    %v188 = vunpack.c.h.b16 %v145
    %v189 = vunpack.c.l.b16 %v146
    %v190 = vunpack.c.h.b16 %v146
    %v191 = vunpack.c.l.b16 %v147
    %v192 = vunpack.c.h.b16 %v147
    %v193 = vunpack.c.l.b16 %v148
    %v194 = vunpack.c.h.b16 %v148
    %v195 = vpack.c.b16 %v183, %v179
    %v196 = vpack.c.b16 %v184, %v180
    %v197 = vpack.c.b16 %v185, %v181
    %v198 = vpack.c.b16 %v186, %v182
    %v199 = vpack.c.b16 %v191, %v187
    %v200 = vpack.c.b16 %v192, %v188
    %v201 = vpack.c.b16 %v193, %v189
    %v202 = vpack.c.b16 %v194, %v190
    %vm211 = vcmask 261120
    %v213 = vsel %vm211, %v140, 0
    %215 = vmatprep.subr.bf16.mxu0 %v196
    %216 = vmatpush1.bf16.msra.mxu0 %v195
    %217 = vmatprep.subr.bf16.mxu0 %v200
    %218 = vmatpush1.bf16.msra.mxu0 %v199
    %219 = vmatprep.subr.bf16.mxu0 0
    %220 = vmatpush1.bf16.msra.mxu0 0
    %221 = vmatprep.subr.bf16.mxu0 0
    %222 = vmatpush1.bf16.msra.mxu0 0
    %223 = vmatprep.subr.bf16.mxu0 0
    %224 = vmatpush1.bf16.msra.mxu0 0
    %225 = vmatprep.subr.bf16.mxu0 0
    %226 = vmatpush1.bf16.msra.mxu0 0
    %227 = vmatprep.subr.bf16.mxu0 0
    %228 = vmatpush1.bf16.msra.mxu0 0
    %229 = vmatprep.subr.bf16.mxu0 0
    %230 = vmatpush1.bf16.msra.mxu0 0
    %231 = vmatprep.subr.bf16.mxu0 0
    %232 = vmatpush1.bf16.msra.mxu0 0
    %233 = vmatprep.subr.bf16.mxu0 0
    %234 = vmatpush1.bf16.msra.mxu0 0
    %235 = vmatprep.subr.bf16.mxu0 0
    %236 = vmatpush1.bf16.msra.mxu0 0
    %237 = vmatprep.subr.bf16.mxu0 0
    %238 = vmatpush1.bf16.msra.mxu0 0
    %239 = vmatprep.subr.bf16.mxu0 0
    %240 = vmatpush1.bf16.msra.mxu0 0
    %241 = vmatprep.subr.bf16.mxu0 0
    %242 = vmatpush1.bf16.msra.mxu0 0
    %243 = vmatprep.subr.bf16.mxu0 0
    %244 = vmatpush1.bf16.msra.mxu0 0
    %245 = vmatprep.subr.bf16.mxu0 0
    %246 = vmatpush1.bf16.msra.mxu0 0
    %247 = vmatprep.mubr.bf16.mxu0 0
    %248 = vmatmul.mubr.bf16.gmra.mrb[0].mxu0 %v213
    %v249 = vpop.f32.mrb[0].mxu0
    %v250 = vadd.f32 %v154, %v249
    %v251 = vpop.f32.mrb[0].mxu0
    %v252 = vadd.f32 %v158, %v251
    %v253 = vpop.f32.mrb[0].mxu0
    %v254 = vpop.f32.mrb[0].mxu0
    %255 = vdwg.mxu0
    %256 = vmatprep.subr.bf16.mxu0 %v198
    %257 = vmatpush1.bf16.msra.mxu0 %v197
    %258 = vmatprep.subr.bf16.mxu0 %v202
    %259 = vmatpush1.bf16.msra.mxu0 %v201
    %260 = vmatprep.subr.bf16.mxu0 0
    %261 = vmatpush1.bf16.msra.mxu0 0
    %262 = vmatprep.subr.bf16.mxu0 0
    %263 = vmatpush1.bf16.msra.mxu0 0
    %264 = vmatprep.subr.bf16.mxu0 0
    %265 = vmatpush1.bf16.msra.mxu0 0
    %266 = vmatprep.subr.bf16.mxu0 0
    %267 = vmatpush1.bf16.msra.mxu0 0
    %268 = vmatprep.subr.bf16.mxu0 0
    %269 = vmatpush1.bf16.msra.mxu0 0
    %270 = vmatprep.subr.bf16.mxu0 0
    %271 = vmatpush1.bf16.msra.mxu0 0
    %272 = vmatprep.subr.bf16.mxu0 0
    %273 = vmatpush1.bf16.msra.mxu0 0
    %274 = vmatprep.subr.bf16.mxu0 0
    %275 = vmatpush1.bf16.msra.mxu0 0
    %276 = vmatprep.subr.bf16.mxu0 0
    %277 = vmatpush1.bf16.msra.mxu0 0
    %278 = vmatprep.subr.bf16.mxu0 0
    %279 = vmatpush1.bf16.msra.mxu0 0
    %280 = vmatprep.subr.bf16.mxu0 0
    %281 = vmatpush1.bf16.msra.mxu0 0
    %282 = vmatprep.subr.bf16.mxu0 0
    %283 = vmatpush1.bf16.msra.mxu0 0
    %284 = vmatprep.subr.bf16.mxu0 0
    %285 = vmatpush1.bf16.msra.mxu0 0
    %286 = vmatprep.subr.bf16.mxu0 0
    %287 = vmatpush1.bf16.msra.mxu0 0
    %288 = vmatprep.mubr.bf16.mxu0 0
    %289 = vmatmul.mubr.bf16.gmra.mrb[0].mxu0 %v213
    %v290 = vpop.f32.mrb[0].mxu0
    %v291 = vadd.f32 %v162, %v290
    %v292 = vpop.f32.mrb[0].mxu0
    %v293 = vadd.f32 %v166, %v292
    %v294 = vpop.f32.mrb[0].mxu0
    %v295 = vpop.f32.mrb[0].mxu0
    %296 = vdwg.mxu0
    %vm297 = vcmp.gt.f32.partialorder %v250, 0.0
    %vm298 = vcmp.gt.f32.partialorder %v252, 0.0
    %vm299 = vcmp.gt.f32.partialorder %v291, 0.0
    %vm300 = vcmp.gt.f32.partialorder %v293, 0.0
    %v301 = vmul.f32 %v250, 0.01
    %v302 = vmul.f32 %v252, 0.01
    %v303 = vmul.f32 %v291, 0.01
    %v304 = vmul.f32 %v293, 0.01
    %v305 = vsel %vm297, %v250, %v301
    %v306 = vsel %vm298, %v252, %v302
    %v307 = vsel %vm299, %v291, %v303
    %v308 = vsel %vm300, %v293, %v304
    %v309 = vpack.c.bf16 %v305, %v305
    %v310 = vpack.c.bf16 %v306, %v306
    %v311 = vpack.c.bf16 %v307, %v307
    %v312 = vpack.c.bf16 %v308, %v308
    %v313 = vld [vmem:[#allocation7] sm:$0xff]
    %v314 = vld [vmem:[#allocation7 + $0x8] sm:$0xff]
    %v315 = vld [vmem:[#allocation7 + $0x10] sm:$0xff]
    %v316 = vld [vmem:[#allocation7 + $0x18] sm:$0xff]
    %v317 = vld [vmem:[#allocation7 + $0x20] sm:$0xff]
    %v318 = vld [vmem:[#allocation7 + $0x28] sm:$0xff]
    %v319 = vld [vmem:[#allocation7 + $0x30] sm:$0xff]
    %v320 = vld [vmem:[#allocation7 + $0x38] sm:$0xff]
    %v321 = vld [vmem:[#allocation7 + $0x40] sm:$0xff]
    %v322 = vld [vmem:[#allocation7 + $0x48] sm:$0xff]
    %v323 = vld [vmem:[#allocation7 + $0x50] sm:$0xff]
    %v324 = vld [vmem:[#allocation7 + $0x58] sm:$0xff]
    %v325 = vld [vmem:[#allocation7 + $0x60] sm:$0xff]
    %v326 = vld [vmem:[#allocation7 + $0x68] sm:$0xff]
    %v327 = vld [vmem:[#allocation7 + $0x70] sm:$0xff]
    %v328 = vld [vmem:[#allocation7 + $0x78] sm:$0xff]
    %v329 = vld [vmem:[#allocation7 + $0x80] sm:$0xff]
    %v330 = vld [vmem:[#allocation7 + $0x88] sm:$0xff]
    %v331 = vld [vmem:[#allocation7 + $0x90] sm:$0xff]
    %v332 = vld [vmem:[#allocation7 + $0x98] sm:$0xff]
    %v333 = vld [vmem:[#allocation7 + $0xa0] sm:$0xff]
    %v334 = vld [vmem:[#allocation7 + $0xa8] sm:$0xff]
    %v335 = vld [vmem:[#allocation7 + $0xb0] sm:$0xff]
    %v336 = vld [vmem:[#allocation7 + $0xb8] sm:$0xff]
    %v337 = vld [vmem:[#allocation7 + $0xc0] sm:$0xff]
    %v338 = vld [vmem:[#allocation7 + $0xc8] sm:$0xff]
    %v339 = vld [vmem:[#allocation7 + $0xd0] sm:$0xff]
    %v340 = vld [vmem:[#allocation7 + $0xd8] sm:$0xff]
    %v341 = vld [vmem:[#allocation7 + $0xe0] sm:$0xff]
    %v342 = vld [vmem:[#allocation7 + $0xe8] sm:$0xff]
    %v343 = vld [vmem:[#allocation7 + $0xf0] sm:$0xff]
    %v344 = vld [vmem:[#allocation7 + $0xf8] sm:$0xff]
    %v345 = vld [vmem:[#allocation7 + $0x100] sm:$0xff]
    %v346 = vld [vmem:[#allocation7 + $0x108] sm:$0xff]
    %v347 = vld [vmem:[#allocation7 + $0x110] sm:$0xff]
    %v348 = vld [vmem:[#allocation7 + $0x118] sm:$0xff]
    %v349 = vld [vmem:[#allocation7 + $0x120] sm:$0xff]
    %v350 = vld [vmem:[#allocation7 + $0x128] sm:$0xff]
    %v351 = vld [vmem:[#allocation7 + $0x130] sm:$0xff]
    %v352 = vld [vmem:[#allocation7 + $0x138] sm:$0xff]
    %v353 = vld [vmem:[#allocation7 + $0x140] sm:$0xff]
    %v354 = vld [vmem:[#allocation7 + $0x148] sm:$0xff]
    %v355 = vld [vmem:[#allocation7 + $0x150] sm:$0xff]
    %v356 = vld [vmem:[#allocation7 + $0x158] sm:$0xff]
    %v357 = vld [vmem:[#allocation7 + $0x160] sm:$0xff]
    %v358 = vld [vmem:[#allocation7 + $0x168] sm:$0xff]
    %v359 = vld [vmem:[#allocation7 + $0x170] sm:$0xff]
    %v360 = vld [vmem:[#allocation7 + $0x178] sm:$0xff]
    %v361 = vld [vmem:[#allocation7 + $0x180] sm:$0xff]
    %v362 = vld [vmem:[#allocation7 + $0x188] sm:$0xff]
    %v363 = vld [vmem:[#allocation7 + $0x190] sm:$0xff]
    %v364 = vld [vmem:[#allocation7 + $0x198] sm:$0xff]
    %v365 = vld [vmem:[#allocation7 + $0x1a0] sm:$0xff]
    %v366 = vld [vmem:[#allocation7 + $0x1a8] sm:$0xff]
    %v367 = vld [vmem:[#allocation7 + $0x1b0] sm:$0xff]
    %v368 = vld [vmem:[#allocation7 + $0x1b8] sm:$0xff]
    %v369 = vld [vmem:[#allocation7 + $0x1c0] sm:$0xff]
    %v370 = vld [vmem:[#allocation7 + $0x1c8] sm:$0xff]
    %v371 = vld [vmem:[#allocation7 + $0x1d0] sm:$0xff]
    %v372 = vld [vmem:[#allocation7 + $0x1d8] sm:$0xff]
    %v373 = vld [vmem:[#allocation7 + $0x1e0] sm:$0xff]
    %v374 = vld [vmem:[#allocation7 + $0x1e8] sm:$0xff]
    %v375 = vld [vmem:[#allocation7 + $0x1f0] sm:$0xff]
    %v376 = vld [vmem:[#allocation7 + $0x1f8] sm:$0xff]
    %v377 = vld [vmem:[%s4] sm:$0x3]
    %v379 = vlaneseq
    %v380 = vshrl.u32 %v379, 7
    %v381 = vsub.s32 0, %v380
    %v382 = vrot.slane %v377, %v381
    %v383 = vlaneseq
    %v384 = vshrl.u32 %v383, 7
    %v385 = vsub.s32 1, %v384
    %v386 = vrot.slane %v377, %v385
    %v453 = vunpack.c.l.b16 %v313
    %v454 = vunpack.c.h.b16 %v313
    %v455 = vunpack.c.l.b16 %v314
    %v456 = vunpack.c.h.b16 %v314
    %v457 = vunpack.c.l.b16 %v315
    %v458 = vunpack.c.h.b16 %v315
    %v459 = vunpack.c.l.b16 %v316
    %v460 = vunpack.c.h.b16 %v316
    %v461 = vunpack.c.l.b16 %v317
    %v462 = vunpack.c.h.b16 %v317
    %v463 = vunpack.c.l.b16 %v318
    %v464 = vunpack.c.h.b16 %v318
    %v465 = vunpack.c.l.b16 %v319
    %v466 = vunpack.c.h.b16 %v319
    %v467 = vunpack.c.l.b16 %v320
    %v468 = vunpack.c.h.b16 %v320
    %v469 = vunpack.c.l.b16 %v321
    %v470 = vunpack.c.h.b16 %v321
    %v471 = vunpack.c.l.b16 %v322
    %v472 = vunpack.c.h.b16 %v322
    %v473 = vunpack.c.l.b16 %v323
    %v474 = vunpack.c.h.b16 %v323
    %v475 = vunpack.c.l.b16 %v324
    %v476 = vunpack.c.h.b16 %v324
    %v477 = vunpack.c.l.b16 %v325
    %v478 = vunpack.c.h.b16 %v325
    %v479 = vunpack.c.l.b16 %v326
    %v480 = vunpack.c.h.b16 %v326
    %v481 = vunpack.c.l.b16 %v327
    %v482 = vunpack.c.h.b16 %v327
    %v483 = vunpack.c.l.b16 %v328
    %v484 = vunpack.c.h.b16 %v328
    %v485 = vunpack.c.l.b16 %v329
    %v486 = vunpack.c.h.b16 %v329
    %v487 = vunpack.c.l.b16 %v330
    %v488 = vunpack.c.h.b16 %v330
    %v489 = vunpack.c.l.b16 %v331
    %v490 = vunpack.c.h.b16 %v331
    %v491 = vunpack.c.l.b16 %v332
    %v492 = vunpack.c.h.b16 %v332
    %v493 = vunpack.c.l.b16 %v333
    %v494 = vunpack.c.h.b16 %v333
    %v495 = vunpack.c.l.b16 %v334
    %v496 = vunpack.c.h.b16 %v334
    %v497 = vunpack.c.l.b16 %v335
    %v498 = vunpack.c.h.b16 %v335
    %v499 = vunpack.c.l.b16 %v336
    %v500 = vunpack.c.h.b16 %v336
    %v501 = vunpack.c.l.b16 %v337
    %v502 = vunpack.c.h.b16 %v337
    %v503 = vunpack.c.l.b16 %v338
    %v504 = vunpack.c.h.b16 %v338
    %v505 = vunpack.c.l.b16 %v339
    %v506 = vunpack.c.h.b16 %v339
    %v507 = vunpack.c.l.b16 %v340
    %v508 = vunpack.c.h.b16 %v340
    %v509 = vunpack.c.l.b16 %v341
    %v510 = vunpack.c.h.b16 %v341
    %v511 = vunpack.c.l.b16 %v342
    %v512 = vunpack.c.h.b16 %v342
    %v513 = vunpack.c.l.b16 %v343
    %v514 = vunpack.c.h.b16 %v343
    %v515 = vunpack.c.l.b16 %v344
    %v516 = vunpack.c.h.b16 %v344
    %v517 = vunpack.c.l.b16 %v345
    %v518 = vunpack.c.h.b16 %v345
    %v519 = vunpack.c.l.b16 %v346
    %v520 = vunpack.c.h.b16 %v346
    %v521 = vunpack.c.l.b16 %v347
    %v522 = vunpack.c.h.b16 %v347
    %v523 = vunpack.c.l.b16 %v348
    %v524 = vunpack.c.h.b16 %v348
    %v525 = vunpack.c.l.b16 %v349
    %v526 = vunpack.c.h.b16 %v349
    %v527 = vunpack.c.l.b16 %v350
    %v528 = vunpack.c.h.b16 %v350
    %v529 = vunpack.c.l.b16 %v351
    %v530 = vunpack.c.h.b16 %v351
    %v531 = vunpack.c.l.b16 %v352
    %v532 = vunpack.c.h.b16 %v352
    %v533 = vunpack.c.l.b16 %v353
    %v534 = vunpack.c.h.b16 %v353
    %v535 = vunpack.c.l.b16 %v354
    %v536 = vunpack.c.h.b16 %v354
    %v537 = vunpack.c.l.b16 %v355
    %v538 = vunpack.c.h.b16 %v355
    %v539 = vunpack.c.l.b16 %v356
    %v540 = vunpack.c.h.b16 %v356
    %v541 = vunpack.c.l.b16 %v357
    %v542 = vunpack.c.h.b16 %v357
    %v543 = vunpack.c.l.b16 %v358
    %v544 = vunpack.c.h.b16 %v358
    %v545 = vunpack.c.l.b16 %v359
    %v546 = vunpack.c.h.b16 %v359
    %v547 = vunpack.c.l.b16 %v360
    %v548 = vunpack.c.h.b16 %v360
    %v549 = vunpack.c.l.b16 %v361
    %v550 = vunpack.c.h.b16 %v361
    %v551 = vunpack.c.l.b16 %v362
    %v552 = vunpack.c.h.b16 %v362
    %v553 = vunpack.c.l.b16 %v363
    %v554 = vunpack.c.h.b16 %v363
    %v555 = vunpack.c.l.b16 %v364
    %v556 = vunpack.c.h.b16 %v364
    %v557 = vunpack.c.l.b16 %v365
    %v558 = vunpack.c.h.b16 %v365
    %v559 = vunpack.c.l.b16 %v366
    %v560 = vunpack.c.h.b16 %v366
    %v561 = vunpack.c.l.b16 %v367
    %v562 = vunpack.c.h.b16 %v367
    %v563 = vunpack.c.l.b16 %v368
    %v564 = vunpack.c.h.b16 %v368
    %v565 = vunpack.c.l.b16 %v369
    %v566 = vunpack.c.h.b16 %v369
    %v567 = vunpack.c.l.b16 %v370
    %v568 = vunpack.c.h.b16 %v370
    %v569 = vunpack.c.l.b16 %v371
    %v570 = vunpack.c.h.b16 %v371
    %v571 = vunpack.c.l.b16 %v372
    %v572 = vunpack.c.h.b16 %v372
    %v573 = vunpack.c.l.b16 %v373
    %v574 = vunpack.c.h.b16 %v373
    %v575 = vunpack.c.l.b16 %v374
    %v576 = vunpack.c.h.b16 %v374
    %v577 = vunpack.c.l.b16 %v375
    %v578 = vunpack.c.h.b16 %v375
    %v579 = vunpack.c.l.b16 %v376
    %v580 = vunpack.c.h.b16 %v376
    %v581 = vpack.c.b16 %v455, %v453
    %v582 = vpack.c.b16 %v456, %v454
    %v583 = vpack.c.b16 %v459, %v457
    %v584 = vpack.c.b16 %v460, %v458
    %v585 = vpack.c.b16 %v463, %v461
    %v586 = vpack.c.b16 %v464, %v462
    %v587 = vpack.c.b16 %v467, %v465
    %v588 = vpack.c.b16 %v468, %v466
    %v589 = vpack.c.b16 %v471, %v469
    %v590 = vpack.c.b16 %v472, %v470
    %v591 = vpack.c.b16 %v475, %v473
    %v592 = vpack.c.b16 %v476, %v474
    %v593 = vpack.c.b16 %v479, %v477
    %v594 = vpack.c.b16 %v480, %v478
    %v595 = vpack.c.b16 %v483, %v481
    %v596 = vpack.c.b16 %v484, %v482
    %v597 = vpack.c.b16 %v487, %v485
    %v598 = vpack.c.b16 %v488, %v486
    %v599 = vpack.c.b16 %v491, %v489
    %v600 = vpack.c.b16 %v492, %v490
    %v601 = vpack.c.b16 %v495, %v493
    %v602 = vpack.c.b16 %v496, %v494
    %v603 = vpack.c.b16 %v499, %v497
    %v604 = vpack.c.b16 %v500, %v498
    %v605 = vpack.c.b16 %v503, %v501
    %v606 = vpack.c.b16 %v504, %v502
    %v607 = vpack.c.b16 %v507, %v505
    %v608 = vpack.c.b16 %v508, %v506
    %v609 = vpack.c.b16 %v511, %v509
    %v610 = vpack.c.b16 %v512, %v510
    %v611 = vpack.c.b16 %v515, %v513
    %v612 = vpack.c.b16 %v516, %v514
    %v613 = vpack.c.b16 %v519, %v517
    %v614 = vpack.c.b16 %v520, %v518
    %v615 = vpack.c.b16 %v523, %v521
    %v616 = vpack.c.b16 %v524, %v522
    %v617 = vpack.c.b16 %v527, %v525
    %v618 = vpack.c.b16 %v528, %v526
    %v619 = vpack.c.b16 %v531, %v529
    %v620 = vpack.c.b16 %v532, %v530
    %v621 = vpack.c.b16 %v535, %v533
    %v622 = vpack.c.b16 %v536, %v534
    %v623 = vpack.c.b16 %v539, %v537
    %v624 = vpack.c.b16 %v540, %v538
    %v625 = vpack.c.b16 %v543, %v541
    %v626 = vpack.c.b16 %v544, %v542
    %v627 = vpack.c.b16 %v547, %v545
    %v628 = vpack.c.b16 %v548, %v546
    %v629 = vpack.c.b16 %v551, %v549
    %v630 = vpack.c.b16 %v552, %v550
    %v631 = vpack.c.b16 %v555, %v553
    %v632 = vpack.c.b16 %v556, %v554
    %v633 = vpack.c.b16 %v559, %v557
    %v634 = vpack.c.b16 %v560, %v558
    %v635 = vpack.c.b16 %v563, %v561
    %v636 = vpack.c.b16 %v564, %v562
    %v637 = vpack.c.b16 %v567, %v565
    %v638 = vpack.c.b16 %v568, %v566
    %v639 = vpack.c.b16 %v571, %v569
    %v640 = vpack.c.b16 %v572, %v570
    %v641 = vpack.c.b16 %v575, %v573
    %v642 = vpack.c.b16 %v576, %v574
    %v643 = vpack.c.b16 %v579, %v577
    %v644 = vpack.c.b16 %v580, %v578
    %709 = vmatprep.subr.bf16.mxu0 %v582
    %710 = vmatpush1.bf16.msra.mxu0 %v581
    %711 = vmatprep.subr.bf16.mxu0 %v584
    %712 = vmatpush1.bf16.msra.mxu0 %v583
    %713 = vmatprep.subr.bf16.mxu0 %v586
    %714 = vmatpush1.bf16.msra.mxu0 %v585
    %715 = vmatprep.subr.bf16.mxu0 %v588
    %716 = vmatpush1.bf16.msra.mxu0 %v587
    %717 = vmatprep.subr.bf16.mxu0 %v590
    %718 = vmatpush1.bf16.msra.mxu0 %v589
    %719 = vmatprep.subr.bf16.mxu0 %v592
    %720 = vmatpush1.bf16.msra.mxu0 %v591
    %721 = vmatprep.subr.bf16.mxu0 %v594
    %722 = vmatpush1.bf16.msra.mxu0 %v593
    %723 = vmatprep.subr.bf16.mxu0 %v596
    %724 = vmatpush1.bf16.msra.mxu0 %v595
    %725 = vmatprep.subr.bf16.mxu0 %v598
    %726 = vmatpush1.bf16.msra.mxu0 %v597
    %727 = vmatprep.subr.bf16.mxu0 %v600
    %728 = vmatpush1.bf16.msra.mxu0 %v599
    %729 = vmatprep.subr.bf16.mxu0 %v602
    %730 = vmatpush1.bf16.msra.mxu0 %v601
    %731 = vmatprep.subr.bf16.mxu0 %v604
    %732 = vmatpush1.bf16.msra.mxu0 %v603
    %733 = vmatprep.subr.bf16.mxu0 %v606
    %734 = vmatpush1.bf16.msra.mxu0 %v605
    %735 = vmatprep.subr.bf16.mxu0 %v608
    %736 = vmatpush1.bf16.msra.mxu0 %v607
    %737 = vmatprep.subr.bf16.mxu0 %v610
    %738 = vmatpush1.bf16.msra.mxu0 %v609
    %739 = vmatprep.subr.bf16.mxu0 %v612
    %740 = vmatpush1.bf16.msra.mxu0 %v611
    %741 = vmatprep.mubr.bf16.mxu0 %v310
    %742 = vmatmul.mubr.bf16.gmra.mrb[0].mxu0 %v309
    %v743 = vpop.f32.mrb[0].mxu0
    %v744 = vadd.f32 %v382, %v743
    %v745 = vpop.f32.mrb[0].mxu0
    %v746 = vadd.f32 %v386, %v745
    %v747 = vpop.f32.mrb[0].mxu0
    %v748 = vpop.f32.mrb[0].mxu0
    %749 = vdwg.mxu0
    %750 = vmatprep.subr.bf16.mxu0 %v614
    %751 = vmatpush1.bf16.msra.mxu0 %v613
    %752 = vmatprep.subr.bf16.mxu0 %v616
    %753 = vmatpush1.bf16.msra.mxu0 %v615
    %754 = vmatprep.subr.bf16.mxu0 %v618
    %755 = vmatpush1.bf16.msra.mxu0 %v617
    %756 = vmatprep.subr.bf16.mxu0 %v620
    %757 = vmatpush1.bf16.msra.mxu0 %v619
    %758 = vmatprep.subr.bf16.mxu0 %v622
    %759 = vmatpush1.bf16.msra.mxu0 %v621
    %760 = vmatprep.subr.bf16.mxu0 %v624
    %761 = vmatpush1.bf16.msra.mxu0 %v623
    %762 = vmatprep.subr.bf16.mxu0 %v626
    %763 = vmatpush1.bf16.msra.mxu0 %v625
    %764 = vmatprep.subr.bf16.mxu0 %v628
    %765 = vmatpush1.bf16.msra.mxu0 %v627
    %766 = vmatprep.subr.bf16.mxu0 %v630
    %767 = vmatpush1.bf16.msra.mxu0 %v629
    %768 = vmatprep.subr.bf16.mxu0 %v632
    %769 = vmatpush1.bf16.msra.mxu0 %v631
    %770 = vmatprep.subr.bf16.mxu0 %v634
    %771 = vmatpush1.bf16.msra.mxu0 %v633
    %772 = vmatprep.subr.bf16.mxu0 %v636
    %773 = vmatpush1.bf16.msra.mxu0 %v635
    %774 = vmatprep.subr.bf16.mxu0 %v638
    %775 = vmatpush1.bf16.msra.mxu0 %v637
    %776 = vmatprep.subr.bf16.mxu0 %v640
    %777 = vmatpush1.bf16.msra.mxu0 %v639
    %778 = vmatprep.subr.bf16.mxu0 %v642
    %779 = vmatpush1.bf16.msra.mxu0 %v641
    %780 = vmatprep.subr.bf16.mxu0 %v644
    %781 = vmatpush1.bf16.msra.mxu0 %v643
    %782 = vmatprep.mubr.bf16.mxu0 %v312
    %783 = vmatmul.mubr.bf16.gmra.mrb[0].mxu0 %v311
    %v784 = vpop.f32.mrb[0].mxu0
    %v785 = vadd.f32 %v744, %v784
    %v786 = vpop.f32.mrb[0].mxu0
    %v787 = vadd.f32 %v746, %v786
    %v788 = vpop.f32.mrb[0].mxu0
    %v789 = vpop.f32.mrb[0].mxu0
    %790 = vdwg.mxu0
    %vm791 = vcmp.gt.f32.partialorder %v785, 0.0
    %vm792 = vcmp.gt.f32.partialorder %v787, 0.0
    %v793 = vmul.f32 %v785, 0.01
    %v794 = vmul.f32 %v787, 0.01
    %v795 = vsel %vm791, %v785, %v793
    %v796 = vsel %vm792, %v787, %v794
    %v797 = vpack.c.bf16 %v795, %v795
    %v798 = vpack.c.bf16 %v796, %v796
    %v799 = vld [vmem:[#allocation8] sm:$0xf]
    %v800 = vld [vmem:[#allocation8 + $0x4] sm:$0xf]
    %v801 = vld [vmem:[#allocation8 + $0x8] sm:$0xf]
    %v802 = vld [vmem:[#allocation8 + $0xc] sm:$0xf]
    %v803 = vld [vmem:[#allocation8 + $0x10] sm:$0xf]
    %v804 = vld [vmem:[#allocation8 + $0x14] sm:$0xf]
    %v805 = vld [vmem:[#allocation8 + $0x18] sm:$0xf]
    %v806 = vld [vmem:[#allocation8 + $0x1c] sm:$0xf]
    %v807 = vld [vmem:[#allocation8 + $0x20] sm:$0xf]
    %v808 = vld [vmem:[#allocation8 + $0x24] sm:$0xf]
    %v809 = vld [vmem:[#allocation8 + $0x28] sm:$0xf]
    %v810 = vld [vmem:[#allocation8 + $0x2c] sm:$0xf]
    %v811 = vld [vmem:[#allocation8 + $0x30] sm:$0xf]
    %v812 = vld [vmem:[#allocation8 + $0x34] sm:$0xf]
    %v813 = vld [vmem:[#allocation8 + $0x38] sm:$0xf]
    %v814 = vld [vmem:[#allocation8 + $0x3c] sm:$0xf]
    %v815 = vld [vmem:[#allocation8 + $0x40] sm:$0xf]
    %v816 = vld [vmem:[#allocation8 + $0x44] sm:$0xf]
    %v817 = vld [vmem:[#allocation8 + $0x48] sm:$0xf]
    %v818 = vld [vmem:[#allocation8 + $0x4c] sm:$0xf]
    %v819 = vld [vmem:[#allocation8 + $0x50] sm:$0xf]
    %v820 = vld [vmem:[#allocation8 + $0x54] sm:$0xf]
    %v821 = vld [vmem:[#allocation8 + $0x58] sm:$0xf]
    %v822 = vld [vmem:[#allocation8 + $0x5c] sm:$0xf]
    %v823 = vld [vmem:[#allocation8 + $0x60] sm:$0xf]
    %v824 = vld [vmem:[#allocation8 + $0x64] sm:$0xf]
    %v825 = vld [vmem:[#allocation8 + $0x68] sm:$0xf]
    %v826 = vld [vmem:[#allocation8 + $0x6c] sm:$0xf]
    %v827 = vld [vmem:[#allocation8 + $0x70] sm:$0xf]
    %v828 = vld [vmem:[#allocation8 + $0x74] sm:$0xf]
    %v829 = vld [vmem:[#allocation8 + $0x78] sm:$0xf]
    %v830 = vld [vmem:[#allocation8 + $0x7c] sm:$0xf]
    %v831 = vld [vmem:[%s6] sm:$0x1]
    %v833 = vlaneseq
    %v834 = vshrl.u32 %v833, 7
    %v835 = vsub.s32 0, %v834
    %v836 = vrot.slane %v831, %v835
    %v870 = vunpack.c.l.b16 %v799
    %v871 = vunpack.c.l.b16 %v800
    %v872 = vunpack.c.l.b16 %v801
    %v873 = vunpack.c.l.b16 %v802
    %v874 = vunpack.c.l.b16 %v803
    %v875 = vunpack.c.l.b16 %v804
    %v876 = vunpack.c.l.b16 %v805
    %v877 = vunpack.c.l.b16 %v806
    %v878 = vunpack.c.l.b16 %v807
    %v879 = vunpack.c.l.b16 %v808
    %v880 = vunpack.c.l.b16 %v809
    %v881 = vunpack.c.l.b16 %v810
    %v882 = vunpack.c.l.b16 %v811
    %v883 = vunpack.c.l.b16 %v812
    %v884 = vunpack.c.l.b16 %v813
    %v885 = vunpack.c.l.b16 %v814
    %v886 = vunpack.c.l.b16 %v815
    %v887 = vunpack.c.l.b16 %v816
    %v888 = vunpack.c.l.b16 %v817
    %v889 = vunpack.c.l.b16 %v818
    %v890 = vunpack.c.l.b16 %v819
    %v891 = vunpack.c.l.b16 %v820
    %v892 = vunpack.c.l.b16 %v821
    %v893 = vunpack.c.l.b16 %v822
    %v894 = vunpack.c.l.b16 %v823
    %v895 = vunpack.c.l.b16 %v824
    %v896 = vunpack.c.l.b16 %v825
    %v897 = vunpack.c.l.b16 %v826
    %v898 = vunpack.c.l.b16 %v827
    %v899 = vunpack.c.l.b16 %v828
    %v900 = vunpack.c.l.b16 %v829
    %v901 = vunpack.c.l.b16 %v830
    %v902 = vpack.c.b16 %v871, %v870
    %v903 = vpack.c.b16 %v873, %v872
    %v904 = vpack.c.b16 %v875, %v874
    %v905 = vpack.c.b16 %v877, %v876
    %v906 = vpack.c.b16 %v879, %v878
    %v907 = vpack.c.b16 %v881, %v880
    %v908 = vpack.c.b16 %v883, %v882
    %v909 = vpack.c.b16 %v885, %v884
    %v910 = vpack.c.b16 %v887, %v886
    %v911 = vpack.c.b16 %v889, %v888
    %v912 = vpack.c.b16 %v891, %v890
    %v913 = vpack.c.b16 %v893, %v892
    %v914 = vpack.c.b16 %v895, %v894
    %v915 = vpack.c.b16 %v897, %v896
    %v916 = vpack.c.b16 %v899, %v898
    %v917 = vpack.c.b16 %v901, %v900
    %934 = vmatprep.subr.bf16.mxu0 0
    %935 = vmatpush1.bf16.msra.mxu0 %v902
    %936 = vmatprep.subr.bf16.mxu0 0
    %937 = vmatpush1.bf16.msra.mxu0 %v903
    %938 = vmatprep.subr.bf16.mxu0 0
    %939 = vmatpush1.bf16.msra.mxu0 %v904
    %940 = vmatprep.subr.bf16.mxu0 0
    %941 = vmatpush1.bf16.msra.mxu0 %v905
    %942 = vmatprep.subr.bf16.mxu0 0
    %943 = vmatpush1.bf16.msra.mxu0 %v906
    %944 = vmatprep.subr.bf16.mxu0 0
    %945 = vmatpush1.bf16.msra.mxu0 %v907
    %946 = vmatprep.subr.bf16.mxu0 0
    %947 = vmatpush1.bf16.msra.mxu0 %v908
    %948 = vmatprep.subr.bf16.mxu0 0
    %949 = vmatpush1.bf16.msra.mxu0 %v909
    %950 = vmatprep.subr.bf16.mxu0 0
    %951 = vmatpush1.bf16.msra.mxu0 %v910
    %952 = vmatprep.subr.bf16.mxu0 0
    %953 = vmatpush1.bf16.msra.mxu0 %v911
    %954 = vmatprep.subr.bf16.mxu0 0
    %955 = vmatpush1.bf16.msra.mxu0 %v912
    %956 = vmatprep.subr.bf16.mxu0 0
    %957 = vmatpush1.bf16.msra.mxu0 %v913
    %958 = vmatprep.subr.bf16.mxu0 0
    %959 = vmatpush1.bf16.msra.mxu0 %v914
    %960 = vmatprep.subr.bf16.mxu0 0
    %961 = vmatpush1.bf16.msra.mxu0 %v915
    %962 = vmatprep.subr.bf16.mxu0 0
    %963 = vmatpush1.bf16.msra.mxu0 %v916
    %964 = vmatprep.subr.bf16.mxu0 0
    %965 = vmatpush1.bf16.msra.mxu0 %v917
    %966 = vmatprep.mubr.bf16.mxu0 %v798
    %967 = vmatmul.mubr.bf16.gmra.mrb[0].mxu0 %v797
    %v968 = vpop.f32.mrb[0].mxu0
    %v969 = vadd.f32 %v836, %v968
    %v970 = vpop.f32.mrb[0].mxu0
    %v971 = vpop.f32.mrb[0].mxu0
    %v972 = vpop.f32.mrb[0].mxu0
    %973 = vdwg.mxu0
    %vm974 = vcmp.gt.f32.partialorder %v969, 0.0
    %v975 = vmul.f32 %v969, 0.01
    %v976 = vsel %vm974, %v969, %v975
    %v977 = vpack.c.bf16 %v976, %v976
    %v978 = vld [vmem:[#allocation10] sm:$0xf]
    %v979 = vld [vmem:[#allocation10 + $0x4] sm:$0xf]
    %v980 = vld [vmem:[#allocation10 + $0x8] sm:$0xf]
    %v981 = vld [vmem:[#allocation10 + $0xc] sm:$0xf]
    %v982 = vld [vmem:[#allocation10 + $0x10] sm:$0xf]
    %v983 = vld [vmem:[#allocation10 + $0x14] sm:$0xf]
    %v984 = vld [vmem:[#allocation10 + $0x18] sm:$0xf]
    %v985 = vld [vmem:[#allocation10 + $0x1c] sm:$0xf]
    %v986 = vld [vmem:[#allocation10 + $0x20] sm:$0xf]
    %v987 = vld [vmem:[#allocation10 + $0x24] sm:$0xf]
    %v988 = vld [vmem:[#allocation10 + $0x28] sm:$0xf]
    %v989 = vld [vmem:[#allocation10 + $0x2c] sm:$0xf]
    %v990 = vld [vmem:[#allocation10 + $0x30] sm:$0xf]
    %v991 = vld [vmem:[#allocation10 + $0x34] sm:$0xf]
    %v992 = vld [vmem:[#allocation10 + $0x38] sm:$0xf]
    %v993 = vld [vmem:[#allocation10 + $0x3c] sm:$0xf]
    %v994 = vld [vmem:[%s8] sm:$0x1]
    %v996 = vlaneseq
    %v997 = vshrl.u32 %v996, 7
    %v998 = vsub.s32 0, %v997
    %v999 = vrot.slane %v994, %v998
    %v1017 = vunpack.c.l.b16 %v978
    %v1018 = vunpack.c.l.b16 %v979
    %v1019 = vunpack.c.l.b16 %v980
    %v1020 = vunpack.c.l.b16 %v981
    %v1021 = vunpack.c.l.b16 %v982
    %v1022 = vunpack.c.l.b16 %v983
    %v1023 = vunpack.c.l.b16 %v984
    %v1024 = vunpack.c.l.b16 %v985
    %v1025 = vunpack.c.l.b16 %v986
    %v1026 = vunpack.c.l.b16 %v987
    %v1027 = vunpack.c.l.b16 %v988
    %v1028 = vunpack.c.l.b16 %v989
    %v1029 = vunpack.c.l.b16 %v990
    %v1030 = vunpack.c.l.b16 %v991
    %v1031 = vunpack.c.l.b16 %v992
    %v1032 = vunpack.c.l.b16 %v993
    %v1033 = vpack.c.b16 %v1018, %v1017
    %v1034 = vpack.c.b16 %v1020, %v1019
    %v1035 = vpack.c.b16 %v1022, %v1021
    %v1036 = vpack.c.b16 %v1024, %v1023
    %v1037 = vpack.c.b16 %v1026, %v1025
    %v1038 = vpack.c.b16 %v1028, %v1027
    %v1039 = vpack.c.b16 %v1030, %v1029
    %v1040 = vpack.c.b16 %v1032, %v1031
    %1049 = vmatprep.subr.bf16.mxu0 0
    %1050 = vmatpush1.bf16.msra.mxu0 %v1033
    %1051 = vmatprep.subr.bf16.mxu0 0
    %1052 = vmatpush1.bf16.msra.mxu0 %v1034
    %1053 = vmatprep.subr.bf16.mxu0 0
    %1054 = vmatpush1.bf16.msra.mxu0 %v1035
    %1055 = vmatprep.subr.bf16.mxu0 0
    %1056 = vmatpush1.bf16.msra.mxu0 %v1036
    %1057 = vmatprep.subr.bf16.mxu0 0
    %1058 = vmatpush1.bf16.msra.mxu0 %v1037
    %1059 = vmatprep.subr.bf16.mxu0 0
    %1060 = vmatpush1.bf16.msra.mxu0 %v1038
    %1061 = vmatprep.subr.bf16.mxu0 0
    %1062 = vmatpush1.bf16.msra.mxu0 %v1039
    %1063 = vmatprep.subr.bf16.mxu0 0
    %1064 = vmatpush1.bf16.msra.mxu0 %v1040
    %1065 = vmatprep.subr.bf16.mxu0 0
    %1066 = vmatpush1.bf16.msra.mxu0 0
    %1067 = vmatprep.subr.bf16.mxu0 0
    %1068 = vmatpush1.bf16.msra.mxu0 0
    %1069 = vmatprep.subr.bf16.mxu0 0
    %1070 = vmatpush1.bf16.msra.mxu0 0
    %1071 = vmatprep.subr.bf16.mxu0 0
    %1072 = vmatpush1.bf16.msra.mxu0 0
    %1073 = vmatprep.subr.bf16.mxu0 0
    %1074 = vmatpush1.bf16.msra.mxu0 0
    %1075 = vmatprep.subr.bf16.mxu0 0
    %1076 = vmatpush1.bf16.msra.mxu0 0
    %1077 = vmatprep.subr.bf16.mxu0 0
    %1078 = vmatpush1.bf16.msra.mxu0 0
    %1079 = vmatprep.subr.bf16.mxu0 0
    %1080 = vmatpush1.bf16.msra.mxu0 0
    %1081 = vmatprep.mubr.bf16.mxu0 0
    %1082 = vmatmul.mubr.bf16.gmra.mrb[0].mxu0 %v977
    %v1083 = vpop.f32.mrb[0].mxu0
    %v1084 = vadd.f32 %v999, %v1083
    %v1085 = vpop.f32.mrb[0].mxu0
    %v1086 = vpop.f32.mrb[0].mxu0
    %v1087 = vpop.f32.mrb[0].mxu0
    %1088 = vdwg.mxu0
    %vm1089 = vcmp.gt.f32.partialorder %v1084, 0.0
    %v1090 = vmul.f32 %v1084, 0.01
    %v1091 = vsel %vm1089, %v1084, %v1090
    %v1092 = vpack.c.bf16 %v1091, %v1091
    %v1093 = vld [vmem:[#allocation11] sm:$0xf]
    %v1094 = vld [vmem:[#allocation11 + $0x4] sm:$0xf]
    %v1095 = vld [vmem:[#allocation11 + $0x8] sm:$0xf]
    %v1096 = vld [vmem:[#allocation11 + $0xc] sm:$0xf]
    %v1097 = vld [vmem:[#allocation11 + $0x10] sm:$0xf]
    %v1098 = vld [vmem:[#allocation11 + $0x14] sm:$0xf]
    %v1099 = vld [vmem:[#allocation11 + $0x18] sm:$0xf]
    %v1100 = vld [vmem:[#allocation11 + $0x1c] sm:$0xf]
    %v1101 = vld [vmem:[#allocation11 + $0x20] sm:$0xf]
    %v1102 = vld [vmem:[#allocation11 + $0x24] sm:$0xf]
    %v1103 = vld [vmem:[#allocation11 + $0x28] sm:$0xf]
    %v1104 = vld [vmem:[#allocation11 + $0x2c] sm:$0xf]
    %v1105 = vld [vmem:[#allocation11 + $0x30] sm:$0xf]
    %v1106 = vld [vmem:[#allocation11 + $0x34] sm:$0xf]
    %v1107 = vld [vmem:[#allocation11 + $0x38] sm:$0xf]
    %v1108 = vld [vmem:[#allocation11 + $0x3c] sm:$0xf]
    %v1109 = vld [vmem:[%s10] sm:$0x1]
    %v1111 = vlaneseq
    %v1112 = vshrl.u32 %v1111, 7
    %v1113 = vsub.s32 0, %v1112
    %v1114 = vrot.slane %v1109, %v1113
    %v1132 = vunpack.c.l.b16 %v1093
    %v1133 = vunpack.c.l.b16 %v1094
    %v1134 = vunpack.c.l.b16 %v1095
    %v1135 = vunpack.c.l.b16 %v1096
    %v1136 = vunpack.c.l.b16 %v1097
    %v1137 = vunpack.c.l.b16 %v1098
    %v1138 = vunpack.c.l.b16 %v1099
    %v1139 = vunpack.c.l.b16 %v1100
    %v1140 = vunpack.c.l.b16 %v1101
    %v1141 = vunpack.c.l.b16 %v1102
    %v1142 = vunpack.c.l.b16 %v1103
    %v1143 = vunpack.c.l.b16 %v1104
    %v1144 = vunpack.c.l.b16 %v1105
    %v1145 = vunpack.c.l.b16 %v1106
    %v1146 = vunpack.c.l.b16 %v1107
    %v1147 = vunpack.c.l.b16 %v1108
    %v1148 = vpack.c.b16 %v1133, %v1132
    %v1149 = vpack.c.b16 %v1135, %v1134
    %v1150 = vpack.c.b16 %v1137, %v1136
    %v1151 = vpack.c.b16 %v1139, %v1138
    %v1152 = vpack.c.b16 %v1141, %v1140
    %v1153 = vpack.c.b16 %v1143, %v1142
    %v1154 = vpack.c.b16 %v1145, %v1144
    %v1155 = vpack.c.b16 %v1147, %v1146
    %1164 = vmatprep.subr.bf16.mxu0 0
    %1165 = vmatpush1.bf16.msra.mxu0 %v1148
    %1166 = vmatprep.subr.bf16.mxu0 0
    %1167 = vmatpush1.bf16.msra.mxu0 %v1149
    %1168 = vmatprep.subr.bf16.mxu0 0
    %1169 = vmatpush1.bf16.msra.mxu0 %v1150
    %1170 = vmatprep.subr.bf16.mxu0 0
    %1171 = vmatpush1.bf16.msra.mxu0 %v1151
    %1172 = vmatprep.subr.bf16.mxu0 0
    %1173 = vmatpush1.bf16.msra.mxu0 %v1152
    %1174 = vmatprep.subr.bf16.mxu0 0
    %1175 = vmatpush1.bf16.msra.mxu0 %v1153
    %1176 = vmatprep.subr.bf16.mxu0 0
    %1177 = vmatpush1.bf16.msra.mxu0 %v1154
    %1178 = vmatprep.subr.bf16.mxu0 0
    %1179 = vmatpush1.bf16.msra.mxu0 %v1155
    %1180 = vmatprep.subr.bf16.mxu0 0
    %1181 = vmatpush1.bf16.msra.mxu0 0
    %1182 = vmatprep.subr.bf16.mxu0 0
    %1183 = vmatpush1.bf16.msra.mxu0 0
    %1184 = vmatprep.subr.bf16.mxu0 0
    %1185 = vmatpush1.bf16.msra.mxu0 0
    %1186 = vmatprep.subr.bf16.mxu0 0
    %1187 = vmatpush1.bf16.msra.mxu0 0
    %1188 = vmatprep.subr.bf16.mxu0 0
    %1189 = vmatpush1.bf16.msra.mxu0 0
    %1190 = vmatprep.subr.bf16.mxu0 0
    %1191 = vmatpush1.bf16.msra.mxu0 0
    %1192 = vmatprep.subr.bf16.mxu0 0
    %1193 = vmatpush1.bf16.msra.mxu0 0
    %1194 = vmatprep.subr.bf16.mxu0 0
    %1195 = vmatpush1.bf16.msra.mxu0 0
    %1196 = vmatprep.mubr.bf16.mxu0 0
    %1197 = vmatmul.mubr.bf16.gmra.mrb[0].mxu0 %v1092
    %v1198 = vpop.f32.mrb[0].mxu0
    %v1199 = vadd.f32 %v1114, %v1198
    %v1200 = vpop.f32.mrb[0].mxu0
    %v1201 = vpop.f32.mrb[0].mxu0
    %v1202 = vpop.f32.mrb[0].mxu0
    %1203 = vdwg.mxu0
    %vm1204 = vcmp.gt.f32.partialorder %v1199, 0.0
    %v1205 = vmul.f32 %v1199, 0.01
    %v1206 = vsel %vm1204, %v1199, %v1205
    %v1207 = vpack.c.bf16 %v1206, %v1206
    %v1208 = vld [vmem:[#allocation13] sm:$0xf]
    %v1209 = vld [vmem:[#allocation13 + $0x4] sm:$0xf]
    %v1210 = vld [vmem:[#allocation13 + $0x8] sm:$0xf]
    %v1211 = vld [vmem:[#allocation13 + $0xc] sm:$0xf]
    %v1212 = vld [vmem:[#allocation13 + $0x10] sm:$0xf]
    %v1213 = vld [vmem:[#allocation13 + $0x14] sm:$0xf]
    %v1214 = vld [vmem:[#allocation13 + $0x18] sm:$0xf]
    %v1215 = vld [vmem:[#allocation13 + $0x1c] sm:$0xf]
    %v1216 = vld [vmem:[#allocation13 + $0x20] sm:$0xf]
    %v1217 = vld [vmem:[#allocation13 + $0x24] sm:$0xf]
    %v1218 = vld [vmem:[#allocation13 + $0x28] sm:$0xf]
    %v1219 = vld [vmem:[#allocation13 + $0x2c] sm:$0xf]
    %v1220 = vld [vmem:[#allocation13 + $0x30] sm:$0xf]
    %v1221 = vld [vmem:[#allocation13 + $0x34] sm:$0xf]
    %v1222 = vld [vmem:[#allocation13 + $0x38] sm:$0xf]
    %v1223 = vld [vmem:[#allocation13 + $0x3c] sm:$0xf]
    %v1224 = vld [vmem:[%s12] sm:$0x1]
    %v1226 = vlaneseq
    %v1227 = vshrl.u32 %v1226, 7
    %v1228 = vsub.s32 0, %v1227
    %v1229 = vrot.slane %v1224, %v1228
    %v1247 = vunpack.c.l.b16 %v1208
    %v1248 = vunpack.c.l.b16 %v1209
    %v1249 = vunpack.c.l.b16 %v1210
    %v1250 = vunpack.c.l.b16 %v1211
    %v1251 = vunpack.c.l.b16 %v1212
    %v1252 = vunpack.c.l.b16 %v1213
    %v1253 = vunpack.c.l.b16 %v1214
    %v1254 = vunpack.c.l.b16 %v1215
    %v1255 = vunpack.c.l.b16 %v1216
    %v1256 = vunpack.c.l.b16 %v1217
    %v1257 = vunpack.c.l.b16 %v1218
    %v1258 = vunpack.c.l.b16 %v1219
    %v1259 = vunpack.c.l.b16 %v1220
    %v1260 = vunpack.c.l.b16 %v1221
    %v1261 = vunpack.c.l.b16 %v1222
    %v1262 = vunpack.c.l.b16 %v1223
    %v1263 = vpack.c.b16 %v1248, %v1247
    %v1264 = vpack.c.b16 %v1250, %v1249
    %v1265 = vpack.c.b16 %v1252, %v1251
    %v1266 = vpack.c.b16 %v1254, %v1253
    %v1267 = vpack.c.b16 %v1256, %v1255
    %v1268 = vpack.c.b16 %v1258, %v1257
    %v1269 = vpack.c.b16 %v1260, %v1259
    %v1270 = vpack.c.b16 %v1262, %v1261
    %1279 = vmatprep.subr.bf16.mxu0 0
    %1280 = vmatpush1.bf16.msra.mxu0 %v1263
    %1281 = vmatprep.subr.bf16.mxu0 0
    %1282 = vmatpush1.bf16.msra.mxu0 %v1264
    %1283 = vmatprep.subr.bf16.mxu0 0
    %1284 = vmatpush1.bf16.msra.mxu0 %v1265
    %1285 = vmatprep.subr.bf16.mxu0 0
    %1286 = vmatpush1.bf16.msra.mxu0 %v1266
    %1287 = vmatprep.subr.bf16.mxu0 0
    %1288 = vmatpush1.bf16.msra.mxu0 %v1267
    %1289 = vmatprep.subr.bf16.mxu0 0
    %1290 = vmatpush1.bf16.msra.mxu0 %v1268
    %1291 = vmatprep.subr.bf16.mxu0 0
    %1292 = vmatpush1.bf16.msra.mxu0 %v1269
    %1293 = vmatprep.subr.bf16.mxu0 0
    %1294 = vmatpush1.bf16.msra.mxu0 %v1270
    %1295 = vmatprep.subr.bf16.mxu0 0
    %1296 = vmatpush1.bf16.msra.mxu0 0
    %1297 = vmatprep.subr.bf16.mxu0 0
    %1298 = vmatpush1.bf16.msra.mxu0 0
    %1299 = vmatprep.subr.bf16.mxu0 0
    %1300 = vmatpush1.bf16.msra.mxu0 0
    %1301 = vmatprep.subr.bf16.mxu0 0
    %1302 = vmatpush1.bf16.msra.mxu0 0
    %1303 = vmatprep.subr.bf16.mxu0 0
    %1304 = vmatpush1.bf16.msra.mxu0 0
    %1305 = vmatprep.subr.bf16.mxu0 0
    %1306 = vmatpush1.bf16.msra.mxu0 0
    %1307 = vmatprep.subr.bf16.mxu0 0
    %1308 = vmatpush1.bf16.msra.mxu0 0
    %1309 = vmatprep.subr.bf16.mxu0 0
    %1310 = vmatpush1.bf16.msra.mxu0 0
    %1311 = vmatprep.mubr.bf16.mxu0 0
    %1312 = vmatmul.mubr.bf16.gmra.mrb[0].mxu0 %v1207
    %v1313 = vpop.f32.mrb[0].mxu0
    %v1314 = vadd.f32 %v1229, %v1313
    %v1315 = vpop.f32.mrb[0].mxu0
    %v1316 = vpop.f32.mrb[0].mxu0
    %v1317 = vpop.f32.mrb[0].mxu0
    %1318 = vdwg.mxu0
    %1319 = vmax.xlane.f32.xlu0 %v1314
    %v1320 = vpop.xlane.xlu0 %1319
    %v1321 = vsub.f32 %v1314, %v1320
    %v1322 = vmul.f32 %v1321, 1.442695
    %v1323 = vpow.pop %v1322
    %1324 = vadd.xlane.f32.xlu0 %v1323
    %v1325 = vpop.xlane.xlu0 %1324
    %v1326 = vrcp.pop %v1325
    %v1327 = vmul.f32 %v1323, %v1326
    %1328 = vrot.lane.b32.xlu0 %v1327, 64
    %v1329 = vpop.permute.xlu0 %1328
    %v1330 = vlaneseq
    %v1331 = vand.u32 %v1330, 127
    %vm1332 = vcmp.lt.s32.totalorder %v1331, 64
    %v1333 = vsel %vm1332, %v1314, %v1329
    %1334 = vst [vmem:[#allocation14] sm:$0xff] %v1333
    // Predicated region
    $region82: #{tpu_custom_call.1} parent=1 // pred_check
      _
    $region83: #{tpu_custom_call.1} parent=1 // pred_check_branch
      %1336 = sbr.rel (0) target = $region85
    $region84: #{tpu_custom_call.1} parent=1 // pred_region
      %s1338 = ssub.s32 128, 128
      %1339 = vsyncadd [#allocation4], %s1338
      %s1341 = sshll.u32 [#allocation14], 4
      %s1342 = int_to_ptr.vmem [resolvable:$true] %s1341
      %1344 = dma.vmem_to_hbm [thread:$0]  %s1342, 128, %s13, [#allocation4]
    $region85: #{tpu_custom_call.1} parent=1 // pred_fallthru
      _
    // Predicated region
    $region86: #{tpu_custom_call.1} parent=1 // pred_check
      _
    $region87: #{tpu_custom_call.1} parent=1 // pred_check_branch
      %1346 = sbr.rel (0) target = $region89
    $region88: #{tpu_custom_call.1} parent=1 // pred_region
      %1347 = dma.done [#allocation4], 128
    $region89: #{tpu_custom_call.1} parent=1 // pred_fallthru
      _
    %1348 = vsyncpa [#allocation3], 1
    %1349 = vsyncpa [#allocation6], 1
    %1350 = vsyncpa [#allocation9], 1
    %1351 = vsyncpa [#allocation12], 1
    %1352 = vsyncpa [#allocation4], 1

</llo_original>
